<compile_context>
chip_gen: v5e
topology: v5e:2x2
jax: 0.10.0
libtpu: 0.0.40
codegen_flags: <defaults>
</compile_context>

<pallas_src>
import math
from functools import partial

import jax
import jax.numpy as jnp
from jax.experimental import pallas as pl
from jax.experimental.pallas import tpu as pltpu

_EPS = 1e-5


def _vmem_capacity_bytes():
    try:
        cap = getattr(pltpu.get_tpu_info(), "vmem_capacity_bytes", None)
        if cap:
            return int(cap)
    except Exception:
        pass
    return 64 << 20  # conservative default (v7x per-core VMEM)


# ---------------------------------------------------------------------------
# Resident path: whole (B, S, D) tensor fits comfortably in VMEM.
# Single fused call -> 1 HBM read + 1 HBM write.
# ---------------------------------------------------------------------------
def _bn_resident_kernel(x_ref, gamma_ref, beta_ref, o_ref, *, inv_n):
    x = x_ref[...].astype(jnp.float32)                                # (B,S,D)
    s = jnp.sum(jnp.sum(x, axis=1, keepdims=True), axis=0, keepdims=True)
    q = jnp.sum(jnp.sum(x * x, axis=1, keepdims=True), axis=0, keepdims=True)
    mean = s * inv_n
    # TODO(synk): E[x^2]-mean^2 can lose precision for data with large offsets;
    # the clamp keeps var non-negative (Chan-style combine would fix it fully).
    var = jnp.maximum(q * inv_n - mean * mean, 0.0)
    scale = gamma_ref[...] * jax.lax.rsqrt(var + _EPS)                # (1,1,D)
    shift = beta_ref[...] - mean * scale
    o_ref[...] = (x * scale + shift).astype(o_ref.dtype)


# ---------------------------------------------------------------------------
# Streaming path, pass 1: per-tile partial (sum, sumsq).  Grid is fully
# parallel (uses both TCs on v7x); ragged tiles are masked with iota.
# ---------------------------------------------------------------------------
def _bn_stats_kernel(x_ref, o_ref, *, b_total, s_total, b_tile, s_tile,
                     mask_b, mask_s):
    x = x_ref[...].astype(jnp.float32)                        # (b_tile,s_tile,D)
    if mask_b or mask_s:
        m = None
        if mask_b:
            b_left = b_total - pl.program_id(0) * b_tile
            m = jax.lax.broadcasted_iota(jnp.int32, x.shape, 0) < b_left
        if mask_s:
            s_left = s_total - pl.program_id(1) * s_tile
            ms = jax.lax.broadcasted_iota(jnp.int32, x.shape, 1) < s_left
            m = ms if m is None else (m & ms)
        x = jnp.where(m, x, 0.0)
    s = jnp.sum(jnp.sum(x, axis=0), axis=0, keepdims=True)    # (1, D)
    q = jnp.sum(jnp.sum(x * x, axis=0), axis=0, keepdims=True)
    o_ref[0:1, :] = s
    o_ref[1:2, :] = q


# ---------------------------------------------------------------------------
# Streaming path, pass 2: y = x * scale + shift (prefolded affine).
# Embarrassingly parallel; partial tail blocks handled by Pallas writeback.
# ---------------------------------------------------------------------------
def _bn_norm_kernel(x_ref, scale_ref, shift_ref, o_ref):
    x = x_ref[...].astype(jnp.float32)
    o_ref[...] = (x * scale_ref[...] + shift_ref[...]).astype(o_ref.dtype)


def _choose_tiles(B, S, D, itemsize, target_bytes):
    """Pick (b_tile, s_tile) so the block is ~target_bytes and layout-legal:
    either s_tile == S (full seq slab, tile over batch) or b_tile == 1 with
    s_tile a multiple of 8."""
    slab = max(S * D * itemsize, 1)
    if slab <= target_bytes:
        b_tile = max(1, min(B, target_bytes // slab))
        s_tile = S
    else:
        b_tile = 1
        rows = max(8, (target_bytes // max(D * itemsize, 1)) // 8 * 8)
        s_tile = S if rows >= S else rows
    return int(b_tile), int(s_tile)


@partial(jax.jit, static_argnames=("force_streaming", "b_tile", "s_tile"))
def batch_norm_pallas(x, gamma, beta, *, force_streaming=False,
                      b_tile=None, s_tile=None):
    """Training-mode BatchNorm1d over the flattened (B*S, D) view of x."""
    B, S, D = x.shape
    N = B * S
    inv_n = 1.0 / float(N)
    itemsize = jnp.dtype(x.dtype).itemsize
    vmem_cap = _vmem_capacity_bytes()

    gamma_f = gamma.astype(jnp.float32)
    beta_f = beta.astype(jnp.float32)

    stored_bytes = N * D * itemsize
    f32_bytes = N * D * 4

    # ----- resident (single fused call) path ------------------------------
    resident_need = 2 * stored_bytes + 3 * f32_bytes + (4 << 20)
    if (not force_streaming) and resident_need <= (vmem_cap * 3) // 4:
        vmem_limit = int(min(max(resident_need + (8 << 20), 32 << 20),
                             (vmem_cap * 9) // 10))
        return pl.pallas_call(
            partial(_bn_resident_kernel, inv_n=inv_n),
            out_shape=jax.ShapeDtypeStruct((B, S, D), x.dtype),
            compiler_params=pltpu.CompilerParams(vmem_limit_bytes=vmem_limit),
        )(x, gamma_f.reshape(1, 1, D), beta_f.reshape(1, 1, D))

    # ----- streaming path: two parallel passes -----------------------------
    # Stats pass only holds 2x input buffers -> bigger tiles; normalize pass
    # holds 2x in + 2x out -> smaller tiles.  Both scale with chip VMEM
    # (v5e/v6e 128 MiB, v7x 64 MiB).
    target_stats = min(16 << 20, vmem_cap // 8)
    target_norm = min(8 << 20, vmem_cap // 16)

    if (b_tile is not None) or (s_tile is not None):
        bt = min(B, int(b_tile)) if b_tile is not None else 1
        st = min(S, int(s_tile)) if s_tile is not None else S
        bt_s, st_s = bt, st
        bt_n, st_n = bt, st
    else:
        bt_s, st_s = _choose_tiles(B, S, D, itemsize, target_stats)
        bt_n, st_n = _choose_tiles(B, S, D, itemsize, target_norm)

    # -- pass 1: per-tile partial sums --------------------------------------
    nb_s = -(-B // bt_s)
    ns_s = -(-S // st_s)
    mask_b = (B % bt_s) != 0
    mask_s = (S % st_s) != 0
    tile_stored = bt_s * st_s * D * itemsize
    tile_f32 = bt_s * st_s * D * 4
    stats_limit = int(min(max(2 * tile_stored + 2 * tile_f32 + (8 << 20), 24 << 20),
                          (vmem_cap * 3) // 4))
    partials = pl.pallas_call(
        partial(_bn_stats_kernel, b_total=B, s_total=S,
                b_tile=bt_s, s_tile=st_s, mask_b=mask_b, mask_s=mask_s),
        out_shape=jax.ShapeDtypeStruct((nb_s, ns_s, 2, D), jnp.float32),
        grid=(nb_s, ns_s),
        in_specs=[pl.BlockSpec((bt_s, st_s, D), lambda bi, si: (bi, si, 0))],
        out_specs=pl.BlockSpec((None, None, 2, D), lambda bi, si: (bi, si, 0, 0)),
        compiler_params=pltpu.CompilerParams(
            dimension_semantics=("parallel", "parallel"),
            vmem_limit_bytes=stats_limit),
    )(x)

    # Tiny finalize (D-sized) outside the kernels: fold mean/var into affine.
    sums = jnp.sum(partials, axis=(0, 1))            # (2, D) f32
    mean = sums[0] * inv_n
    var = jnp.maximum(sums[1] * inv_n - mean * mean, 0.0)
    scale = gamma_f * jax.lax.rsqrt(var + _EPS)
    shift = beta_f - mean * scale
    scale3 = scale.reshape(1, 1, D)
    shift3 = shift.reshape(1, 1, D)

    # -- pass 2: normalize ---------------------------------------------------
    nb_n = -(-B // bt_n)
    ns_n = -(-S // st_n)
    tile_stored_n = bt_n * st_n * D * itemsize
    tile_f32_n = bt_n * st_n * D * 4
    norm_limit = int(min(max(4 * tile_stored_n + 2 * tile_f32_n + (8 << 20), 24 << 20),
                         (vmem_cap * 3) // 4))
    # TODO(synk): add input_output_aliases={0: 0} here when the caller donates x
    # (in-place output, lower peak HBM; no bandwidth change).
    out = pl.pallas_call(
        _bn_norm_kernel,
        out_shape=jax.ShapeDtypeStruct((B, S, D), x.dtype),
        grid=(nb_n, ns_n),
        in_specs=[pl.BlockSpec((bt_n, st_n, D), lambda bi, si: (bi, si, 0)),
                  pl.BlockSpec((1, 1, D), lambda bi, si: (0, 0, 0)),
                  pl.BlockSpec((1, 1, D), lambda bi, si: (0, 0, 0))],
        out_specs=pl.BlockSpec((bt_n, st_n, D), lambda bi, si: (bi, si, 0)),
        compiler_params=pltpu.CompilerParams(
            dimension_semantics=("parallel", "parallel"),
            vmem_limit_bytes=norm_limit),
    )(x, scale3, shift3)
    return out


def reference_batch_norm(x, gamma, beta):
    B, S, D = x.shape
    x2 = x.reshape(-1, D).astype(jnp.float32)
    mean = x2.mean(axis=0, keepdims=True)
    var = x2.var(axis=0, keepdims=True)      # biased, like BatchNorm training
    y = ((x2 - mean) * jax.lax.rsqrt(var + _EPS)
         * gamma[None, :].astype(jnp.float32)
         + beta[None, :].astype(jnp.float32))
    return y.reshape(B, S, D).astype(x.dtype)


if __name__ == "__main__":
    key = jax.random.PRNGKey(0)
    kx, kg, kb, kx2, kx3 = jax.random.split(key, 5)

    # Primary small shape consistent with the module: (batch, graph_size, embed_dim).
    B, S, D = 2, 8, 32
    x = jax.random.normal(kx, (B, S, D), dtype=jnp.float32)

    # Deterministic params mirroring init_parameters(): uniform(-stdv, stdv),
    # stdv = 1/sqrt(D).
    stdv = 1.0 / math.sqrt(D)
    gamma = jax.random.uniform(kg, (D,), minval=-stdv, maxval=stdv, dtype=jnp.float32)
    beta = jax.random.uniform(kb, (D,), minval=-stdv, maxval=stdv, dtype=jnp.float32)

    out = jax.block_until_ready(batch_norm_pallas(x, gamma, beta))
    ref = reference_batch_norm(x, gamma, beta)
    assert out.shape == x.shape and out.dtype == x.dtype
    assert jnp.allclose(out, ref, atol=1e-5, rtol=1e-5), "mismatch (resident)"

    # Streaming path, evenly divisible tiles (no masking needed).
    xb = jax.random.normal(kx2, (2, 64, 32), dtype=jnp.float32)
    outb = jax.block_until_ready(
        batch_norm_pallas(xb, gamma, beta, force_streaming=True, b_tile=1, s_tile=8))
    refb = reference_batch_norm(xb, gamma, beta)
    assert jnp.allclose(outb, refb, atol=1e-5, rtol=1e-5), "mismatch (streaming, even)"

    # Streaming path, ragged sequence tail (masked stats + partial writeback).
    D2 = 128
    stdv2 = 1.0 / math.sqrt(D2)
    gamma2 = jax.random.uniform(kg, (D2,), minval=-stdv2, maxval=stdv2, dtype=jnp.float32)
    beta2 = jax.random.uniform(kb, (D2,), minval=-stdv2, maxval=stdv2, dtype=jnp.float32)
    xc = jax.random.normal(kx3, (3, 17, D2), dtype=jnp.float32)
    outc = jax.block_until_ready(
        batch_norm_pallas(xc, gamma2, beta2, force_streaming=True, b_tile=1, s_tile=8))
    refc = reference_batch_norm(xc, gamma2, beta2)
    assert jnp.allclose(outc, refc, atol=1e-5, rtol=1e-5), "mismatch (streaming, ragged S)"

    # Streaming path, ragged batch tail (full-S tiles, mask on the batch axis).
    outd = jax.block_until_ready(
        batch_norm_pallas(xc, gamma2, beta2, force_streaming=True, b_tile=2))
    assert jnp.allclose(outd, refc, atol=1e-5, rtol=1e-5), "mismatch (streaming, ragged B)"

    print("KERNEL_OK")
</pallas_src>

<mosaic_0001>
module attributes {stable_mosaic.version = 11 : i64} {
  func.func @_bn_resident_kernel(%arg0: memref<2x8x32xf32, #tpu.memory_space<vmem>>, %arg1: memref<1x1x32xf32, #tpu.memory_space<vmem>>, %arg2: memref<1x1x32xf32, #tpu.memory_space<vmem>>, %arg3: memref<2x8x32xf32, #tpu.memory_space<vmem>>) attributes {dimension_semantics = [], scalar_prefetch = 0 : i64, scratch_operands = 0 : i64, tpu.core_type = #tpu.core_type<tc>} {
    %c0 = arith.constant 0 : index
    %c0_0 = arith.constant 0 : index
    %c0_1 = arith.constant 0 : index
    %0 = vector.load %arg0[%c0, %c0_0, %c0_1] : memref<2x8x32xf32, #tpu.memory_space<vmem>>, vector<2x8x32xf32>
    %cst = arith.constant dense<0.000000e+00> : vector<2x32xf32>
    %1 = vector.multi_reduction <add>, %0, %cst [1] : vector<2x8x32xf32> to vector<2x32xf32>
    %2 = vector.shape_cast %1 : vector<2x32xf32> to vector<2x1x32xf32>
    %cst_2 = arith.constant dense<0.000000e+00> : vector<1x32xf32>
    %3 = vector.multi_reduction <add>, %2, %cst_2 [0] : vector<2x1x32xf32> to vector<1x32xf32>
    %4 = vector.shape_cast %3 : vector<1x32xf32> to vector<1x1x32xf32>
    %5 = arith.mulf %0, %0 : vector<2x8x32xf32>
    %cst_3 = arith.constant dense<0.000000e+00> : vector<2x32xf32>
    %6 = vector.multi_reduction <add>, %5, %cst_3 [1] : vector<2x8x32xf32> to vector<2x32xf32>
    %7 = vector.shape_cast %6 : vector<2x32xf32> to vector<2x1x32xf32>
    %cst_4 = arith.constant dense<0.000000e+00> : vector<1x32xf32>
    %8 = vector.multi_reduction <add>, %7, %cst_4 [0] : vector<2x1x32xf32> to vector<1x32xf32>
    %9 = vector.shape_cast %8 : vector<1x32xf32> to vector<1x1x32xf32>
    %cst_5 = arith.constant 6.250000e-02 : f32
    %10 = vector.broadcast %cst_5 : f32 to vector<1x1x32xf32>
    %11 = arith.mulf %4, %10 : vector<1x1x32xf32>
    %cst_6 = arith.constant 6.250000e-02 : f32
    %12 = vector.broadcast %cst_6 : f32 to vector<1x1x32xf32>
    %13 = arith.mulf %9, %12 : vector<1x1x32xf32>
    %14 = arith.mulf %11, %11 : vector<1x1x32xf32>
    %15 = arith.subf %13, %14 : vector<1x1x32xf32>
    %cst_7 = arith.constant 0.000000e+00 : f32
    %16 = vector.broadcast %cst_7 : f32 to vector<1x1x32xf32>
    %17 = arith.maximumf %15, %16 : vector<1x1x32xf32>
    %c0_8 = arith.constant 0 : index
    %c0_9 = arith.constant 0 : index
    %c0_10 = arith.constant 0 : index
    %18 = vector.load %arg1[%c0_8, %c0_9, %c0_10] : memref<1x1x32xf32, #tpu.memory_space<vmem>>, vector<1x1x32xf32>
    %cst_11 = arith.constant 9.99999974E-6 : f32
    %19 = vector.broadcast %cst_11 : f32 to vector<1x1x32xf32>
    %20 = arith.addf %17, %19 : vector<1x1x32xf32>
    %21 = math.rsqrt %20 : vector<1x1x32xf32>
    %22 = arith.mulf %18, %21 : vector<1x1x32xf32>
    %c0_12 = arith.constant 0 : index
    %c0_13 = arith.constant 0 : index
    %c0_14 = arith.constant 0 : index
    %23 = vector.load %arg2[%c0_12, %c0_13, %c0_14] : memref<1x1x32xf32, #tpu.memory_space<vmem>>, vector<1x1x32xf32>
    %24 = arith.mulf %11, %22 : vector<1x1x32xf32>
    %25 = arith.subf %23, %24 : vector<1x1x32xf32>
    %26 = vector.broadcast %22 : vector<1x1x32xf32> to vector<2x8x32xf32>
    %27 = arith.mulf %0, %26 : vector<2x8x32xf32>
    %28 = vector.broadcast %25 : vector<1x1x32xf32> to vector<2x8x32xf32>
    %29 = arith.addf %27, %28 : vector<2x8x32xf32>
    %c0_15 = arith.constant 0 : index
    %c0_16 = arith.constant 0 : index
    %c0_17 = arith.constant 0 : index
    %30 = vector.load %arg3[%c0_15, %c0_16, %c0_17] : memref<2x8x32xf32, #tpu.memory_space<vmem>>, vector<2x8x32xf32>
    tpu.vector_store %arg3[%c0_15, %c0_16, %c0_17], %29 {strides = array<i32>} : memref<2x8x32xf32, #tpu.memory_space<vmem>>, vector<2x8x32xf32>,
    return
  }
}

</mosaic_0001>

<llo_original>
// kernel: batch_norm_pallas.1
$region0: #{batch_norm_pallas.1}
  #allocation0 [shape = 'u32[]', space=smem, size = 0x4, offset = 0x4, fixed_abs, tag = 'smem constant byte address 0x4 - core index']
  #allocation1 [shape = 'u32[72,128]{1,0:T(1,128)}', space=vmem, size = 0x9000, scoped, tag = 'internal scratch']
  %s0 = inlined_call_operand.hbm [shape: f32[2,8,32], index: 0, kind: input, shape index: {}]
  %s1 = inlined_call_operand.vmem [shape: f32[1,1,32], index: 1, kind: input, shape index: {}]
  %s2 = inlined_call_operand.vmem [shape: f32[1,1,32], index: 2, kind: input, shape index: {}]
  %s3 = inlined_call_operand.hbm [shape: f32[2,8,32], index: 3, kind: output, shape index: {}]
  %s4 = sld [smem:[#allocation0]]
  $region26: #{batch_norm_pallas.1} parent=0
    _
  %s6 = ssub.s32 1, %s4
  %s7 = scalar_select 0, %s6, %s4
  $region1: #{batch_norm_pallas.1} parent=0
    #allocation2 [shape = 'u8[8192]{0}', space=vmem, size = 0x2000, scoped, tag = 'input window, operand 0, single buffered']
    #allocation3 [shape = 's32[1]{0}', space=sflag, size = 0x4, scoped, tag = 'scoped memory for batch_norm_pallas.1']
    #allocation4 [shape = 's32[1]{0}', space=sflag, size = 0x4, scoped, tag = 'scoped memory for batch_norm_pallas.1']
    #allocation5 [shape = 'u8[8192]{0}', space=vmem, size = 0x2000, scoped, tag = 'output window, operand 0, single buffered']
    %8 = vsyncpa [#allocation3], 0
    %9 = vsyncpa [#allocation4], 0
    // Predicated region
    $region2: #{batch_norm_pallas.1} parent=1 // pred_check
      _
    $region3: #{batch_norm_pallas.1} parent=1 // pred_check_branch
      %11 = sbr.rel (0) target = $region5
    $region4: #{batch_norm_pallas.1} parent=1 // pred_region
      %13 = vsyncadd [#allocation3], 0
      %s14 = sshll.u32 %s0, 4
      %s15 = int_to_ptr.hbm [resolvable:$true] %s14
      %s16 = sshll.u32 [#allocation2], 4
      %s17 = int_to_ptr.vmem [resolvable:$true] %s16
      %22 = dma.hbm_to_vmem [thread:$0]  %s15, 256, %s17, [#allocation3], 128, 128, 8
    $region5: #{batch_norm_pallas.1} parent=1 // pred_fallthru
      _
    // Predicated region
    $region6: #{batch_norm_pallas.1} parent=1 // pred_check
      _
    $region7: #{batch_norm_pallas.1} parent=1 // pred_check_branch
      %24 = sbr.rel (0) target = $region9
    $region8: #{batch_norm_pallas.1} parent=1 // pred_region
      _
    $region9: #{batch_norm_pallas.1} parent=1 // pred_fallthru
      _
    // Predicated region
    $region10: #{batch_norm_pallas.1} parent=1 // pred_check
      _
    $region11: #{batch_norm_pallas.1} parent=1 // pred_check_branch
      %26 = sbr.rel (0) target = $region13
    $region12: #{batch_norm_pallas.1} parent=1 // pred_region
      _
    $region13: #{batch_norm_pallas.1} parent=1 // pred_fallthru
      _
    // Predicated region
    $region14: #{batch_norm_pallas.1} parent=1 // pred_check
      _
    $region15: #{batch_norm_pallas.1} parent=1 // pred_check_branch
      %28 = sbr.rel (0) target = $region17
    $region16: #{batch_norm_pallas.1} parent=1 // pred_region
      %30 = dma.done [#allocation3], 256
    $region17: #{batch_norm_pallas.1} parent=1 // pred_fallthru
      _
    %v31 = vld [vmem:[#allocation2] sm:$0xff]
    %v32 = vld [vmem:[#allocation2 + $0x8] sm:$0xff]
    %vm33 = vcmask 261120
    %v34 = vsel %vm33, %v31, 0.0
    %v35 = vrot.slane %v34, 4
    %v36 = vadd.f32 %v34, %v35
    %v37 = vrot.slane %v36, 2
    %v38 = vadd.f32 %v36, %v37
    %v39 = vrot.slane %v38, 1
    %v40 = vadd.f32 %v38, %v39
    %v41 = vsel %vm33, %v32, 0.0
    %v42 = vrot.slane %v41, 4
    %v43 = vadd.f32 %v41, %v42
    %v44 = vrot.slane %v43, 2
    %v45 = vadd.f32 %v43, %v44
    %v46 = vrot.slane %v45, 1
    %v47 = vadd.f32 %v45, %v46
    %v48 = vsel %vm33, %v40, 0.0
    %v49 = vsel %vm33, %v47, 0.0
    %v50 = vadd.f32 %v48, %v49
    %v51 = vmul.f32 %v31, %v31
    %v52 = vmul.f32 %v32, %v32
    %v53 = vsel %vm33, %v51, 0.0
    %v54 = vrot.slane %v53, 4
    %v55 = vadd.f32 %v53, %v54
    %v56 = vrot.slane %v55, 2
    %v57 = vadd.f32 %v55, %v56
    %v58 = vrot.slane %v57, 1
    %v59 = vadd.f32 %v57, %v58
    %v60 = vsel %vm33, %v52, 0.0
    %v61 = vrot.slane %v60, 4
    %v62 = vadd.f32 %v60, %v61
    %v63 = vrot.slane %v62, 2
    %v64 = vadd.f32 %v62, %v63
    %v65 = vrot.slane %v64, 1
    %v66 = vadd.f32 %v64, %v65
    %v67 = vsel %vm33, %v59, 0.0
    %v68 = vsel %vm33, %v66, 0.0
    %v69 = vadd.f32 %v67, %v68
    %v70 = vmul.f32 %v50, 0.0625
    %v71 = vmul.f32 %v69, 0.0625
    %v72 = vmul.f32 %v70, %v70
    %v73 = vsub.f32 %v71, %v72
    %v74 = vmax.f32 %v73, 0.0
    %v75 = vld [vmem:[%s1] sm:$0x1]
    %v76 = vadd.f32 %v74, 1e-05
    %v77 = vrsqrt.pop %v76
    %v78 = vmul.f32 %v77, %v76
    %v79 = vmul.f32 %v78, %v77
    %v80 = vmul.f32 0.5, %v79
    %v81 = vsub.f32 1.5, %v80
    %v82 = vmul.f32 %v77, %v81
    %vm83 = vweird.f32 %v76
    %vm84 = vweird.f32 %v77
    %vm85 = vmor %vm83, %vm84
    %v86 = vsel %vm85, %v77, %v82
    %v87 = vmul.f32 %v75, %v86
    %v88 = vld [vmem:[%s2] sm:$0x1]
    %v89 = vmul.f32 %v70, %v87
    %v90 = vsub.f32 %v88, %v89
    %v92 = vperm.slane %v87, 0
    %v94 = vmul.f32 %v31, %v92
    %v95 = vmul.f32 %v32, %v92
    %v97 = vperm.slane %v90, 0
    %v99 = vadd.f32 %v94, %v97
    %v100 = vadd.f32 %v95, %v97
    %101 = vst.msk [vmem:[#allocation5] sm:$0xff] %vm33, %v99
    %102 = vst.msk [vmem:[#allocation5 + $0x8] sm:$0xff] %vm33, %v100
    // Predicated region
    $region18: #{batch_norm_pallas.1} parent=1 // pred_check
      _
    $region19: #{batch_norm_pallas.1} parent=1 // pred_check_branch
      %104 = sbr.rel (0) target = $region21
    $region20: #{batch_norm_pallas.1} parent=1 // pred_region
      %106 = vsyncadd [#allocation4], 0
      %s107 = sshll.u32 [#allocation5], 4
      %s108 = int_to_ptr.vmem [resolvable:$true] %s107
      %s109 = sshll.u32 %s3, 4
      %s110 = int_to_ptr.hbm [resolvable:$true] %s109
      %115 = dma.vmem_to_hbm [thread:$0]  %s108, 256, %s110, [#allocation4], 128, 128, 8
    $region21: #{batch_norm_pallas.1} parent=1 // pred_fallthru
      _
    // Predicated region
    $region22: #{batch_norm_pallas.1} parent=1 // pred_check
      _
    $region23: #{batch_norm_pallas.1} parent=1 // pred_check_branch
      %117 = sbr.rel (0) target = $region25
    $region24: #{batch_norm_pallas.1} parent=1 // pred_region
      %119 = dma.done [#allocation4], 256
    $region25: #{batch_norm_pallas.1} parent=1 // pred_fallthru
      _
    %120 = vsyncpa [#allocation3], 1
    %121 = vsyncpa [#allocation4], 1

</llo_original>
